<compile_context>
chip_gen: v5e
topology: v5e:2x2
jax: 0.10.0
libtpu: 0.0.40
codegen_flags: <defaults>
</compile_context>

<pallas_src>
import functools

import jax
import jax.numpy as jnp
from jax.experimental import pallas as pl
from jax.experimental.pallas import tpu as pltpu


def _spec_normalize_kernel(x_ref, o_ref, *, eps):
    # x_ref / o_ref: (Rblk, H*W) VMEM tile; each row is one (b, c) spectrogram.
    x = x_ref[...]
    xf = x.astype(jnp.float32)
    mn = jnp.min(xf, axis=-1, keepdims=True)   # joint min over (H, W)
    mx = jnp.max(xf, axis=-1, keepdims=True)   # joint max over (H, W)
    # One reciprocal per row (EUP), then a single VPU multiply per element.
    inv = pl.reciprocal(mx - mn + eps, approx=False)
    o_ref[...] = ((xf - mn) * inv).astype(o_ref.dtype)


def _choose_row_block(total_rows: int, row_len: int, itemsize: int,
                      vmem_budget_bytes: int = 12 * 1024 * 1024) -> int:
    """Pick a row-block size.

    Budget accounts for 4 tiles (double-buffered input + output) and stays
    under the smallest default scoped-VMEM limit (v5e: 16 MiB).
    """
    max_rows = max(1, vmem_budget_bytes // (4 * row_len * itemsize))
    if total_rows <= max_rows:
        # Full row extent is always a legal block dim, even if not a
        # multiple of 8.
        return total_rows
    rblk = (max_rows // 8) * 8
    return max(rblk, 8)


def spec_normalize(x: jax.Array, eps: float = 1e-8) -> jax.Array:
    """Pallas implementation of SpecNormalize.forward for NCHW input."""
    B, C, H, W = x.shape
    rows = B * C
    row_len = H * W
    itemsize = jnp.dtype(x.dtype).itemsize

    # Free reshape for contiguous NCHW: one row per (b, c) spectrogram.
    x2 = x.reshape(rows, row_len)

    rblk = _choose_row_block(rows, row_len, itemsize)
    grid = (pl.cdiv(rows, rblk),)

    kernel = functools.partial(_spec_normalize_kernel, eps=eps)
    out2 = pl.pallas_call(
        kernel,
        out_shape=jax.ShapeDtypeStruct((rows, row_len), x.dtype),
        grid_spec=pltpu.PrefetchScalarGridSpec(
            num_scalar_prefetch=0,
            grid=grid,
            in_specs=[pl.BlockSpec((rblk, row_len), lambda i: (i, 0))],
            out_specs=pl.BlockSpec((rblk, row_len), lambda i: (i, 0)),
        ),
        compiler_params=pltpu.CompilerParams(
            dimension_semantics=("parallel",),
        ),
        cost_estimate=pl.CostEstimate(
            flops=3 * rows * row_len,
            transcendentals=0,
            bytes_accessed=2 * rows * row_len * itemsize,
        ),
    )(x2)
    return out2.reshape(B, C, H, W)


def _spec_normalize_ref(x: jnp.ndarray, eps: float = 1e-8) -> jnp.ndarray:
    # Pure-JAX reference mirroring the PyTorch forward exactly.
    min_ = jnp.min(jnp.min(x, axis=-1, keepdims=True), axis=-2, keepdims=True)
    max_ = jnp.max(jnp.max(x, axis=-1, keepdims=True), axis=-2, keepdims=True)
    return (x - min_) / (max_ - min_ + eps)


if __name__ == "__main__":
    key = jax.random.PRNGKey(0)
    B, C, H, W = 2, 4, 16, 16
    x = jax.random.normal(key, (B, C, H, W), dtype=jnp.float32)

    out = spec_normalize(x, eps=1e-8)
    out = jax.block_until_ready(out)

    ref = _spec_normalize_ref(x, eps=1e-8)
    assert out.shape == (B, C, H, W)
    assert jnp.allclose(out, ref, atol=1e-6, rtol=1e-6), "mismatch vs reference"

    print("KERNEL_OK")
</pallas_src>

<mosaic_0001>
module attributes {stable_mosaic.version = 11 : i64} {
  func.func @_spec_normalize_kernel(%arg0: i32, %arg1: memref<8x256xf32, #tpu.memory_space<vmem>>, %arg2: memref<8x256xf32, #tpu.memory_space<vmem>>) attributes {dimension_semantics = [#tpu.dimension_semantics<parallel>], iteration_bounds = array<i64: 1>, scalar_prefetch = 0 : i64, scratch_operands = 0 : i64, tpu.core_type = #tpu.core_type<tc>, window_params = [{transform_indices = @transform_0, window_bounds = array<i64: 8, 256>}, {transform_indices = @transform_1, window_bounds = array<i64: 8, 256>}]} {
    %c0 = arith.constant 0 : index
    %c0_0 = arith.constant 0 : index
    %0 = vector.load %arg1[%c0, %c0_0] : memref<8x256xf32, #tpu.memory_space<vmem>>, vector<8x256xf32>
    %cst = arith.constant dense<0x7F800000> : vector<8xf32>
    %1 = vector.multi_reduction <minimumf>, %0, %cst [1] : vector<8x256xf32> to vector<8xf32>
    %2 = vector.shape_cast %1 : vector<8xf32> to vector<8x1xf32>
    %cst_1 = arith.constant dense<0xFF800000> : vector<8xf32>
    %3 = vector.multi_reduction <maximumf>, %0, %cst_1 [1] : vector<8x256xf32> to vector<8xf32>
    %4 = vector.shape_cast %3 : vector<8xf32> to vector<8x1xf32>
    %5 = arith.subf %4, %2 : vector<8x1xf32>
    %cst_2 = arith.constant 9.99999993E-9 : f32
    %6 = vector.broadcast %cst_2 : f32 to vector<8x1xf32>
    %7 = arith.addf %5, %6 : vector<8x1xf32>
    %8 = tpu.reciprocal %7 : vector<8x1xf32> -> vector<8x1xf32>
    %9 = vector.broadcast %2 : vector<8x1xf32> to vector<8x256xf32>
    %10 = arith.subf %0, %9 : vector<8x256xf32>
    %11 = vector.broadcast %8 : vector<8x1xf32> to vector<8x256xf32>
    %12 = arith.mulf %10, %11 : vector<8x256xf32>
    %c0_3 = arith.constant 0 : index
    %c0_4 = arith.constant 0 : index
    %13 = vector.load %arg2[%c0_3, %c0_4] : memref<8x256xf32, #tpu.memory_space<vmem>>, vector<8x256xf32>
    tpu.vector_store %arg2[%c0_3, %c0_4], %12 {strides = array<i32>} : memref<8x256xf32, #tpu.memory_space<vmem>>, vector<8x256xf32>,
    return
  }
  func.func @transform_0(%arg0: i32) -> (i32, i32) {
    %c0_i32 = arith.constant 0 : i32
    %c0_i32_0 = arith.constant 0 : i32
    return %arg0, %c0_i32 : i32, i32
  }
  func.func @transform_1(%arg0: i32) -> (i32, i32) {
    %c0_i32 = arith.constant 0 : i32
    %c0_i32_0 = arith.constant 0 : i32
    return %arg0, %c0_i32 : i32, i32
  }
}

</mosaic_0001>

<llo_original>
// kernel: tpu_custom_call.1
$region0: #{tpu_custom_call.1}
  #allocation0 [shape = 'u32[]', space=smem, size = 0x4, offset = 0x4, fixed_abs, tag = 'smem constant byte address 0x4 - core index']
  #allocation1 [shape = 'u32[72,128]{1,0:T(1,128)}', space=vmem, size = 0x9000, scoped, tag = 'internal scratch']
  %s0 = inlined_call_operand.hbm [shape: f32[8,256], index: 0, kind: input, shape index: {}]
  %s1 = inlined_call_operand.hbm [shape: f32[8,256], index: 1, kind: output, shape index: {}]
  %s2 = sld [smem:[#allocation0]]
  $region18: #{tpu_custom_call.1} parent=0
    _
  %s4 = ssub.s32 1, %s2
  %s5 = scalar_select 0, %s4, %s2
  $region1: #{tpu_custom_call.1} parent=0
    #allocation2 [shape = 'u8[8192]{0}', space=vmem, size = 0x2000, scoped, tag = 'input window, operand 0, single buffered']
    #allocation3 [shape = 's32[1]{0}', space=sflag, size = 0x4, scoped, tag = 'scoped memory for tpu_custom_call.1']
    #allocation4 [shape = 's32[1]{0}', space=sflag, size = 0x4, scoped, tag = 'scoped memory for tpu_custom_call.1']
    #allocation5 [shape = 'u8[8192]{0}', space=vmem, size = 0x2000, scoped, tag = 'output window, operand 0, single buffered']
    %6 = vsyncpa [#allocation3], 0
    %7 = vsyncpa [#allocation4], 0
    // Predicated region
    $region2: #{tpu_custom_call.1} parent=1 // pred_check
      _
    $region3: #{tpu_custom_call.1} parent=1 // pred_check_branch
      %9 = sbr.rel (0) target = $region5
    $region4: #{tpu_custom_call.1} parent=1 // pred_region
      %11 = vsyncadd [#allocation3], 0
      %s13 = sshll.u32 %s0, 4
      %s14 = int_to_ptr.hbm [resolvable:$true] %s13
      %s15 = sshll.u32 [#allocation2], 4
      %s16 = int_to_ptr.vmem [resolvable:$true] %s15
      %18 = dma.hbm_to_vmem [thread:$0]  %s14, 256, %s16, [#allocation3]
    $region5: #{tpu_custom_call.1} parent=1 // pred_fallthru
      _
    // Predicated region
    $region6: #{tpu_custom_call.1} parent=1 // pred_check
      _
    $region7: #{tpu_custom_call.1} parent=1 // pred_check_branch
      %20 = sbr.rel (0) target = $region9
    $region8: #{tpu_custom_call.1} parent=1 // pred_region
      %22 = dma.done [#allocation3], 256
    $region9: #{tpu_custom_call.1} parent=1 // pred_fallthru
      _
    %v23 = vld [vmem:[#allocation2] sm:$0xff]
    %v24 = vld [vmem:[#allocation2 + $0x8] sm:$0xff]
    %v25 = vmin.f32 %v23, %v24
    %26 = vmin.xlane.f32.xlu0 %v25
    %v27 = vpop.xlane.xlu0 %26
    %v28 = vmax.f32 %v23, %v24
    %29 = vmax.xlane.f32.xlu0 %v28
    %v30 = vpop.xlane.xlu0 %29
    %v31 = vsub.f32 %v30, %v27
    %v32 = vadd.f32 %v31, 1e-08
    %v33 = vrcp.pop %v32
    %v34 = vmul.f32 %v32, %v33
    %v35 = vsub.f32 1.0, %v34
    %v36 = vmul.f32 %v33, %v35
    %v37 = vadd.f32 %v33, %v36
    %vm38 = vweird.f32 %v32
    %vm39 = vweird.f32 %v33
    %vm40 = vmor %vm38, %vm39
    %v41 = vsel %vm40, %v33, %v37
    %v42 = vand.u32 2147483647, %v32
    %vm43 = vcmp.eq.f32.partialorder %v42, 8.507059e+37
    %v44 = vand.u32 %v32, 2147483648
    %v45 = vor.u32 1.1754944e-38, %v44
    %v46 = vsel %vm43, %v45, %v41
    %v47 = vsub.f32 %v23, %v27
    %v48 = vsub.f32 %v24, %v27
    %v49 = vmul.f32 %v47, %v46
    %v50 = vmul.f32 %v48, %v46
    %51 = vst [vmem:[#allocation5] sm:$0xff] %v49
    %52 = vst [vmem:[#allocation5 + $0x8] sm:$0xff] %v50
    // Predicated region
    $region10: #{tpu_custom_call.1} parent=1 // pred_check
      _
    $region11: #{tpu_custom_call.1} parent=1 // pred_check_branch
      %54 = sbr.rel (0) target = $region13
    $region12: #{tpu_custom_call.1} parent=1 // pred_region
      %56 = vsyncadd [#allocation4], 0
      %s58 = sshll.u32 [#allocation5], 4
      %s59 = int_to_ptr.vmem [resolvable:$true] %s58
      %s60 = sshll.u32 %s1, 4
      %s61 = int_to_ptr.hbm [resolvable:$true] %s60
      %63 = dma.vmem_to_hbm [thread:$0]  %s59, 256, %s61, [#allocation4]
    $region13: #{tpu_custom_call.1} parent=1 // pred_fallthru
      _
    // Predicated region
    $region14: #{tpu_custom_call.1} parent=1 // pred_check
      _
    $region15: #{tpu_custom_call.1} parent=1 // pred_check_branch
      %65 = sbr.rel (0) target = $region17
    $region16: #{tpu_custom_call.1} parent=1 // pred_region
      %67 = dma.done [#allocation4], 256
    $region17: #{tpu_custom_call.1} parent=1 // pred_fallthru
      _
    %68 = vsyncpa [#allocation3], 1
    %69 = vsyncpa [#allocation4], 1

</llo_original>
